<compile_context>
chip_gen: v7x
topology: tpu7x:2x2x1
jax: 0.10.0
libtpu: 0.0.40
codegen_flags: <defaults>
</compile_context>

<pallas_src>
import jax
import jax.numpy as jnp
from jax.experimental import pallas as pl
from jax.experimental.pallas import tpu as pltpu


def _round_up(x, m):
    return pl.cdiv(x, m) * m


def ffn_kernel(x_ref, w1_ref, b1_ref, w2_ref, b2_ref, o_ref, acc_ref):
    # x_ref : (tm, n_embd)   f32  (constant block index across the hidden axis,
    #                              so Pallas DMAs it once per row tile)
    # w1_ref: (n_embd, tk_h) bf16   b1_ref: (1, tk_h)   f32
    # w2_ref: (tk_h, n_embd) bf16   b2_ref: (1, n_embd) f32
    # o_ref : (tm, n_embd)   f32    acc_ref: (tm, n_embd) f32 scratch
    k = pl.program_id(1)

    @pl.when(k == 0)
    def _init():
        acc_ref[...] = jnp.zeros_like(acc_ref)

    # bf16 MXU operands with f32 accumulation.  bias-add + ReLU stay in f32 on
    # the VPU (v5e has no bf16 VPU); the hidden chunk is re-quantized to bf16
    # for the second MXU pass.  Live f32 intermediate is only (tm, tk_h).
    xb = x_ref[...].astype(jnp.bfloat16)
    h = jnp.dot(xb, w1_ref[...], preferred_element_type=jnp.float32)
    h = jnp.maximum(h + b1_ref[...], 0.0).astype(jnp.bfloat16)
    acc_ref[...] += jnp.dot(h, w2_ref[...], preferred_element_type=jnp.float32)

    # TODO(synk): dropout omitted (identity in eval mode).
    @pl.when(k == pl.num_programs(1) - 1)
    def _finalize():
        o_ref[...] = (acc_ref[...] + b2_ref[...]).astype(o_ref.dtype)


def prepare_params(w1, b1, w2, b2):
    """One-time conversion OUTSIDE the hot path: bf16 MXU weights, (1, N) f32 biases."""
    n_embd, hidden = w1.shape
    return (w1.astype(jnp.bfloat16),
            b1.reshape(1, hidden).astype(jnp.float32),
            w2.astype(jnp.bfloat16),
            b2.reshape(1, n_embd).astype(jnp.float32))


def _vmem_capacity_bytes():
    try:
        return int(pltpu.get_tpu_info().vmem_capacity_bytes)
    except Exception:
        return 64 << 20  # conservative fallback (v7x per-TC VMEM)


def _vmem_estimate(tm, tk, n_embd):
    """Rough per-core VMEM footprint (bytes) of one pipelined grid step."""
    x_io = 2 * tm * n_embd * 4            # double-buffered f32 x tile
    o_io = 2 * tm * n_embd * 4            # double-buffered f32 out tile
    acc = tm * n_embd * 4                 # f32 accumulator scratch
    w1 = 2 * n_embd * tk * 2              # double-buffered bf16 W1 slab
    w2 = 2 * tk * n_embd * 2              # double-buffered bf16 W2 slab
    bias = 2 * tk * 4 + n_embd * 4
    live = tm * tk * 6 + tm * n_embd * 2  # f32 h + bf16 h + bf16 x temporaries
    return x_io + o_io + acc + w1 + w2 + bias + live


def _pick_tiles(M, n_embd, hidden, tm_req, tk_req, vmem_budget):
    # Hidden chunk: full hidden when small, else the largest multiple of 128
    # <= tk_req that divides hidden (keeps every W1/W2/b1 block in-bounds).
    if hidden <= tk_req:
        tk = hidden
    else:
        tk = hidden
        for cand in range((tk_req // 128) * 128, 127, -128):
            if hidden % cand == 0:
                tk = cand
                break
    # Row tile: multiple of 8 sublanes, no larger than the rounded-up row
    # count, halved until the pipeline fits in the per-core VMEM budget.
    tm = max(8, min(int(tm_req), int(_round_up(M, 8))) // 8 * 8)
    while tm > 8 and _vmem_estimate(tm, tk, n_embd) + (4 << 20) > vmem_budget:
        tm = max(8, (tm // 2) // 8 * 8)
    return tm, tk


def feed_forward(x, params, *, tm=512, tk_hidden=512):
    """x: (B, T, n_embd) f32; params from prepare_params(). Returns (B, T, n_embd) f32."""
    w1_bf, b1_2d, w2_bf, b2_2d = params
    B, T, n_embd = x.shape
    hidden = w1_bf.shape[1]
    M = B * T
    x2d = x.reshape(M, n_embd)

    vmem_cap = _vmem_capacity_bytes()
    vmem_budget = (vmem_cap * 3) // 4          # ~96 MiB v5e/v6e, ~48 MiB v7x
    tm_eff, tk_eff = _pick_tiles(M, n_embd, hidden, tm, tk_hidden, vmem_budget)

    grid = (pl.cdiv(M, tm_eff), hidden // tk_eff)   # rows parallel, hidden reduction last

    vmem_limit = int(min(max(_vmem_estimate(tm_eff, tk_eff, n_embd) + (8 << 20),
                             32 << 20), vmem_budget))

    flops = 4 * M * n_embd * hidden            # two (M, n_embd, hidden) matmuls
    bytes_accessed = (M * n_embd * 4           # x read (f32, once per row tile)
                      + M * n_embd * 4         # out write (f32)
                      + int(grid[0]) * (w1_bf.size + w2_bf.size) * 2  # streamed bf16 weights
                      + b1_2d.size * 4 + b2_2d.size * 4)

    # NOTE: for real configs n_embd is a multiple of 128 (lane-dense stores).
    # For n_embd < 128 (toy test shape) the block spans the full array dim,
    # which is legal but uses masked stores -- don't benchmark that shape.
    out2d = pl.pallas_call(
        ffn_kernel,
        out_shape=jax.ShapeDtypeStruct((M, n_embd), jnp.float32),
        grid_spec=pltpu.PrefetchScalarGridSpec(
            num_scalar_prefetch=0,
            grid=grid,
            in_specs=[
                pl.BlockSpec((tm_eff, n_embd), lambda i, k: (i, 0)),   # x rows
                pl.BlockSpec((n_embd, tk_eff), lambda i, k: (0, k)),   # W1 slab
                pl.BlockSpec((1, tk_eff), lambda i, k: (0, k)),        # b1 slab
                pl.BlockSpec((tk_eff, n_embd), lambda i, k: (k, 0)),   # W2 slab
                pl.BlockSpec((1, n_embd), lambda i, k: (0, 0)),        # b2 (constant, tiny)
            ],
            out_specs=pl.BlockSpec((tm_eff, n_embd), lambda i, k: (i, 0)),
            scratch_shapes=[pltpu.VMEM((tm_eff, n_embd), jnp.float32)],
        ),
        compiler_params=pltpu.CompilerParams(
            dimension_semantics=("parallel", "arbitrary"),
            vmem_limit_bytes=vmem_limit,
        ),
        cost_estimate=pl.CostEstimate(
            flops=flops, transcendentals=0, bytes_accessed=bytes_accessed),
    )(x2d, w1_bf, b1_2d, w2_bf, b2_2d)

    return out2d.reshape(B, T, n_embd)


def init_params(key, n_embd):
    """Deterministic init mimicking nn.Linear default (U(-1/sqrt(fan_in), 1/sqrt(fan_in)))."""
    hidden = 4 * n_embd
    k1, k2, k3, k4 = jax.random.split(key, 4)
    bound1 = 1.0 / jnp.sqrt(n_embd)
    bound2 = 1.0 / jnp.sqrt(hidden)
    w1 = jax.random.uniform(k1, (n_embd, hidden), jnp.float32, -bound1, bound1)
    b1 = jax.random.uniform(k2, (hidden,), jnp.float32, -bound1, bound1)
    w2 = jax.random.uniform(k3, (hidden, n_embd), jnp.float32, -bound2, bound2)
    b2 = jax.random.uniform(k4, (n_embd,), jnp.float32, -bound2, bound2)
    return w1, b1, w2, b2


if __name__ == "__main__":
    key = jax.random.PRNGKey(0)
    B, T, n_embd = 2, 8, 32            # small shapes consistent with the module
    kx, kp = jax.random.split(key)
    x = jax.random.normal(kx, (B, T, n_embd), jnp.float32)
    w1, b1, w2, b2 = init_params(kp, n_embd)

    params = prepare_params(w1, b1, w2, b2)   # one-time bf16 weight conversion
    out = feed_forward(x, params)
    out = jax.block_until_ready(out)

    # reference check in plain JAX (pure f32 path)
    ref = jnp.maximum(x.reshape(-1, n_embd) @ w1 + b1, 0.0) @ w2 + b2
    ref = ref.reshape(B, T, n_embd)
    assert out.shape == (B, T, n_embd)
    assert out.dtype == jnp.float32
    # bf16 MXU operands (x, W1, h, W2) -> loosened tolerance vs f32 reference
    assert jnp.allclose(out, ref, atol=2e-2, rtol=2e-2), float(jnp.max(jnp.abs(out - ref)))

    print("KERNEL_OK")
</pallas_src>

<mosaic_0001>
module attributes {stable_mosaic.version = 11 : i64} {
  func.func @ffn_kernel(%arg0: i32, %arg1: i32, %arg2: memref<16x32xf32, #tpu.memory_space<vmem>>, %arg3: memref<32x128xbf16, #tpu.memory_space<vmem>>, %arg4: memref<1x128xf32, #tpu.memory_space<vmem>>, %arg5: memref<128x32xbf16, #tpu.memory_space<vmem>>, %arg6: memref<1x32xf32, #tpu.memory_space<vmem>>, %arg7: memref<16x32xf32, #tpu.memory_space<vmem>>, %arg8: memref<16x32xf32, #tpu.memory_space<vmem>>) attributes {dimension_semantics = [#tpu.dimension_semantics<parallel>, #tpu.dimension_semantics<arbitrary>], iteration_bounds = array<i64: 1, 1>, scalar_prefetch = 0 : i64, scratch_operands = 1 : i64, tpu.core_type = #tpu.core_type<tc>, window_params = [{transform_indices = @transform_0, window_bounds = array<i64: 16, 32>}, {transform_indices = @transform_1, window_bounds = array<i64: 32, 128>}, {transform_indices = @transform_2, window_bounds = array<i64: 1, 128>}, {transform_indices = @transform_3, window_bounds = array<i64: 128, 32>}, {pipeline_mode = #tpu.pipeline_mode<synchronous>, transform_indices = @transform_4, window_bounds = array<i64: 1, 32>}, {transform_indices = @transform_5, window_bounds = array<i64: 16, 32>}]} {
    %c0_i32 = arith.constant 0 : i32
    %0 = arith.cmpi eq, %arg1, %c0_i32 : i32
    %1 = arith.extui %0 : i1 to i32
    %c0_i32_0 = arith.constant 0 : i32
    %2 = arith.cmpi ne, %1, %c0_i32_0 : i32
    scf.if %2 {
      %cst_16 = arith.constant 0.000000e+00 : f32
      %21 = vector.broadcast %cst_16 : f32 to vector<16x32xf32>
      %c0_17 = arith.constant 0 : index
      %c0_18 = arith.constant 0 : index
      %22 = vector.load %arg8[%c0_17, %c0_18] : memref<16x32xf32, #tpu.memory_space<vmem>>, vector<16x32xf32>
      tpu.vector_store %arg8[%c0_17, %c0_18], %21 {strides = array<i32>} : memref<16x32xf32, #tpu.memory_space<vmem>>, vector<16x32xf32>,
    } else {
    }
    %c0 = arith.constant 0 : index
    %c0_1 = arith.constant 0 : index
    %3 = vector.load %arg2[%c0, %c0_1] : memref<16x32xf32, #tpu.memory_space<vmem>>, vector<16x32xf32>
    %4 = arith.truncf %3 : vector<16x32xf32> to vector<16x32xbf16>
    %c0_2 = arith.constant 0 : index
    %c0_3 = arith.constant 0 : index
    %5 = vector.load %arg3[%c0_2, %c0_3] : memref<32x128xbf16, #tpu.memory_space<vmem>>, vector<32x128xbf16>
    %cst = arith.constant dense<0.000000e+00> : vector<16x128xf32>
    %6 = tpu.matmul %4, %5, %cst {dimension_numbers = #tpu.dot_dimension_numbers<[1], [0], [0], [1], [0, 0, 1, 1], [], []>} : vector<16x32xbf16>, vector<32x128xbf16>, vector<16x128xf32> -> vector<16x128xf32>
    %c0_4 = arith.constant 0 : index
    %c0_5 = arith.constant 0 : index
    %7 = vector.load %arg4[%c0_4, %c0_5] : memref<1x128xf32, #tpu.memory_space<vmem>>, vector<1x128xf32>
    %8 = vector.broadcast %7 : vector<1x128xf32> to vector<16x128xf32>
    %9 = arith.addf %6, %8 : vector<16x128xf32>
    %cst_6 = arith.constant 0.000000e+00 : f32
    %10 = vector.broadcast %cst_6 : f32 to vector<16x128xf32>
    %11 = arith.maximumf %9, %10 : vector<16x128xf32>
    %12 = arith.truncf %11 : vector<16x128xf32> to vector<16x128xbf16>
    %c0_7 = arith.constant 0 : index
    %c0_8 = arith.constant 0 : index
    %13 = vector.load %arg8[%c0_7, %c0_8] : memref<16x32xf32, #tpu.memory_space<vmem>>, vector<16x32xf32>
    %c0_9 = arith.constant 0 : index
    %c0_10 = arith.constant 0 : index
    %14 = vector.load %arg5[%c0_9, %c0_10] : memref<128x32xbf16, #tpu.memory_space<vmem>>, vector<128x32xbf16>
    %cst_11 = arith.constant dense<0.000000e+00> : vector<16x32xf32>
    %15 = tpu.matmul %12, %14, %cst_11 {dimension_numbers = #tpu.dot_dimension_numbers<[1], [0], [0], [1], [0, 0, 1, 1], [], []>} : vector<16x128xbf16>, vector<128x32xbf16>, vector<16x32xf32> -> vector<16x32xf32>
    %16 = arith.addf %13, %15 : vector<16x32xf32>
    %c0_12 = arith.constant 0 : index
    %c0_13 = arith.constant 0 : index
    %17 = vector.load %arg8[%c0_12, %c0_13] : memref<16x32xf32, #tpu.memory_space<vmem>>, vector<16x32xf32>
    tpu.vector_store %arg8[%c0_12, %c0_13], %16 {strides = array<i32>} : memref<16x32xf32, #tpu.memory_space<vmem>>, vector<16x32xf32>,
    %c0_i32_14 = arith.constant 0 : i32
    %18 = arith.cmpi eq, %arg1, %c0_i32_14 : i32
    %19 = arith.extui %18 : i1 to i32
    %c0_i32_15 = arith.constant 0 : i32
    %20 = arith.cmpi ne, %19, %c0_i32_15 : i32
    scf.if %20 {
      %c0_16 = arith.constant 0 : index
      %c0_17 = arith.constant 0 : index
      %21 = vector.load %arg8[%c0_16, %c0_17] : memref<16x32xf32, #tpu.memory_space<vmem>>, vector<16x32xf32>
      %c0_18 = arith.constant 0 : index
      %c0_19 = arith.constant 0 : index
      %22 = vector.load %arg6[%c0_18, %c0_19] : memref<1x32xf32, #tpu.memory_space<vmem>>, vector<1x32xf32>
      %23 = vector.broadcast %22 : vector<1x32xf32> to vector<16x32xf32>
      %24 = arith.addf %21, %23 : vector<16x32xf32>
      %c0_20 = arith.constant 0 : index
      %c0_21 = arith.constant 0 : index
      %25 = vector.load %arg7[%c0_20, %c0_21] : memref<16x32xf32, #tpu.memory_space<vmem>>, vector<16x32xf32>
      tpu.vector_store %arg7[%c0_20, %c0_21], %24 {strides = array<i32>} : memref<16x32xf32, #tpu.memory_space<vmem>>, vector<16x32xf32>,
    } else {
    }
    return
  }
  func.func @transform_0(%arg0: i32, %arg1: i32) -> (i32, i32) {
    %c0_i32 = arith.constant 0 : i32
    %c0_i32_0 = arith.constant 0 : i32
    return %arg0, %c0_i32 : i32, i32
  }
  func.func @transform_1(%arg0: i32, %arg1: i32) -> (i32, i32) {
    %c0_i32 = arith.constant 0 : i32
    %c0_i32_0 = arith.constant 0 : i32
    return %c0_i32, %arg1 : i32, i32
  }
  func.func @transform_2(%arg0: i32, %arg1: i32) -> (i32, i32) {
    %c0_i32 = arith.constant 0 : i32
    %c0_i32_0 = arith.constant 0 : i32
    return %c0_i32, %arg1 : i32, i32
  }
  func.func @transform_3(%arg0: i32, %arg1: i32) -> (i32, i32) {
    %c0_i32 = arith.constant 0 : i32
    %c0_i32_0 = arith.constant 0 : i32
    return %arg1, %c0_i32 : i32, i32
  }
  func.func @transform_4(%arg0: i32, %arg1: i32) -> (i32, i32) {
    %c0_i32 = arith.constant 0 : i32
    %c0_i32_0 = arith.constant 0 : i32
    %c0_i32_1 = arith.constant 0 : i32
    return %c0_i32, %c0_i32_0 : i32, i32
  }
  func.func @transform_5(%arg0: i32, %arg1: i32) -> (i32, i32) {
    %c0_i32 = arith.constant 0 : i32
    %c0_i32_0 = arith.constant 0 : i32
    return %arg0, %c0_i32 : i32, i32
  }
}

</mosaic_0001>

<llo_original>
// kernel: tpu_custom_call.1
$region0: #{tpu_custom_call.1}
  #allocation0 [shape = 'u32[]', space=smem, size = 0x4, offset = 0x4, fixed_abs, tag = 'smem constant byte address 0x4 - core index']
  #allocation1 [shape = 'u32[144,128]{1,0:T(1,128)}', space=vmem, size = 0x12000, scoped, tag = 'internal scratch']
  #allocation2 [shape = 'f32[16,32]{1,0:T(8,128)}', space=vmem, size = 0x2000, scoped, tag = 'scratch operand']
  %s0 = inlined_call_operand.vmem [shape: f32[16,32], index: 0, kind: input, shape index: {}]
  %s1 = inlined_call_operand.vmem [shape: bf16[32,128], index: 1, kind: input, shape index: {}]
  %s2 = inlined_call_operand.vmem [shape: f32[1,128], index: 2, kind: input, shape index: {}]
  %s3 = inlined_call_operand.vmem [shape: bf16[128,32], index: 3, kind: input, shape index: {}]
  %s4 = inlined_call_operand.vmem [shape: f32[1,32], index: 4, kind: input, shape index: {}]
  %s5 = inlined_call_operand.hbm [shape: f32[16,32], index: 5, kind: output, shape index: {}]
  %s6 = sld [smem:[#allocation0]]
  $region38: #{tpu_custom_call.1} parent=0
    _
  %s8 = ssub.s32 1, %s6
  %s9 = scalar_select 0, %s8, %s6
  $region1: #{tpu_custom_call.1} parent=0
    #allocation3 [shape = 'u8[8192]{0}', space=vmem, size = 0x2000, scoped, tag = 'output window, operand 0, single buffered']
    #allocation4 [shape = 's32[1]{0}', space=sflag, size = 0x4, scoped, tag = 'scoped memory for tpu_custom_call.1']
    %10 = vsyncpa [#allocation4], 0
    // Predicated region
    $region2: #{tpu_custom_call.1} parent=1 // pred_check
      _
    $region3: #{tpu_custom_call.1} parent=1 // pred_check_branch
      %12 = sbr.rel (0) target = $region5
    $region4: #{tpu_custom_call.1} parent=1 // pred_region
      _
    $region5: #{tpu_custom_call.1} parent=1 // pred_fallthru
      _
    // Predicated region
    $region6: #{tpu_custom_call.1} parent=1 // pred_check
      _
    $region7: #{tpu_custom_call.1} parent=1 // pred_check_branch
      %14 = sbr.rel (0) target = $region9
    $region8: #{tpu_custom_call.1} parent=1 // pred_region
      _
    $region9: #{tpu_custom_call.1} parent=1 // pred_fallthru
      _
    // Predicated region
    $region10: #{tpu_custom_call.1} parent=1 // pred_check
      _
    $region11: #{tpu_custom_call.1} parent=1 // pred_check_branch
      %16 = sbr.rel (0) target = $region13
    $region12: #{tpu_custom_call.1} parent=1 // pred_region
      _
    $region13: #{tpu_custom_call.1} parent=1 // pred_fallthru
      _
    // Predicated region
    $region14: #{tpu_custom_call.1} parent=1 // pred_check
      _
    $region15: #{tpu_custom_call.1} parent=1 // pred_check_branch
      %18 = sbr.rel (0) target = $region17
    $region16: #{tpu_custom_call.1} parent=1 // pred_region
      _
    $region17: #{tpu_custom_call.1} parent=1 // pred_fallthru
      _
    // Predicated region
    $region18: #{tpu_custom_call.1} parent=1 // pred_check
      _
    $region19: #{tpu_custom_call.1} parent=1 // pred_check_branch
      %20 = sbr.rel (0) target = $region21
    $region20: #{tpu_custom_call.1} parent=1 // pred_region
      _
    $region21: #{tpu_custom_call.1} parent=1 // pred_fallthru
      _
    %p22 = scmp.eq.s32.totalorder 0, 0
    // Predicated region
    $region22: #{tpu_custom_call.1} parent=1 // pred_check
      %p23 = pneg %p22
    $region23: #{tpu_custom_call.1} parent=1 // pred_check_branch
      %25 = sbr.rel (%p23) target = $region25
    $region24: #{tpu_custom_call.1} parent=1 // pred_region
      %vm26 = vcmask 261120
      %27 = vst.msk [vmem:[#allocation2] sm:$0xff] %vm26, 0.0
      %28 = vst.msk [vmem:[#allocation2 + $0x8] sm:$0xff] %vm26, 0.0
    $region25: #{tpu_custom_call.1} parent=1 // pred_fallthru
      _
    %v29 = vld [vmem:[%s0] sm:$0xff]
    %v30 = vld [vmem:[%s0 + $0x8] sm:$0xff]
    %v31 = vpack.c.bf16 %v30, %v29
    %v32 = vld [vmem:[%s1] sm:$0xf]
    %v33 = vld [vmem:[%s1 + $0x4] sm:$0xf]
    %v34 = vld [vmem:[%s1 + $0x8] sm:$0xf]
    %v35 = vld [vmem:[%s1 + $0xc] sm:$0xf]
    %v36 = vld [vmem:[%s2] sm:$0x1]
    %v38 = vlaneseq
    %v39 = vshrl.u32 %v38, 7
    %v40 = vsub.s32 0, %v39
    %v41 = vrot.slane %v36, %v40
    %v47 = vunpack.c.l.b16 %v32
    %v48 = vunpack.c.l.b16 %v33
    %v49 = vunpack.c.l.b16 %v34
    %v50 = vunpack.c.l.b16 %v35
    %v51 = vpack.c.b16 %v48, %v47
    %v52 = vpack.c.b16 %v50, %v49
    %vm55 = vcmask 261120
    %v57 = vsel %vm55, %v31, 0
    %59 = vmatprep.subr.bf16.mxu0 0
    %60 = vmatpush1.bf16.msra.mxu0 %v51
    %61 = vmatprep.subr.bf16.mxu0 0
    %62 = vmatpush1.bf16.msra.mxu0 %v52
    %63 = vmatprep.subr.bf16.mxu0 0
    %64 = vmatpush1.bf16.msra.mxu0 0
    %65 = vmatprep.subr.bf16.mxu0 0
    %66 = vmatpush1.bf16.msra.mxu0 0
    %67 = vmatprep.subr.bf16.mxu0 0
    %68 = vmatpush1.bf16.msra.mxu0 0
    %69 = vmatprep.subr.bf16.mxu0 0
    %70 = vmatpush1.bf16.msra.mxu0 0
    %71 = vmatprep.subr.bf16.mxu0 0
    %72 = vmatpush1.bf16.msra.mxu0 0
    %73 = vmatprep.subr.bf16.mxu0 0
    %74 = vmatpush1.bf16.msra.mxu0 0
    %75 = vmatprep.subr.bf16.mxu0 0
    %76 = vmatpush1.bf16.msra.mxu0 0
    %77 = vmatprep.subr.bf16.mxu0 0
    %78 = vmatpush1.bf16.msra.mxu0 0
    %79 = vmatprep.subr.bf16.mxu0 0
    %80 = vmatpush1.bf16.msra.mxu0 0
    %81 = vmatprep.subr.bf16.mxu0 0
    %82 = vmatpush1.bf16.msra.mxu0 0
    %83 = vmatprep.subr.bf16.mxu0 0
    %84 = vmatpush1.bf16.msra.mxu0 0
    %85 = vmatprep.subr.bf16.mxu0 0
    %86 = vmatpush1.bf16.msra.mxu0 0
    %87 = vmatprep.subr.bf16.mxu0 0
    %88 = vmatpush1.bf16.msra.mxu0 0
    %89 = vmatprep.subr.bf16.mxu0 0
    %90 = vmatpush1.bf16.msra.mxu0 0
    %91 = vmatprep.mubr.bf16.mxu0 0
    %92 = vmatmul.mubr.bf16.gmra.mrb[0].mxu0 %v57
    %v93 = vpop.f32.mrb[0].mxu0
    %v94 = vadd.f32 %v41, %v93
    %v95 = vpop.f32.mrb[0].mxu0
    %v96 = vpop.f32.mrb[0].mxu0
    %v97 = vadd.f32 %v41, %v96
    %v98 = vpop.f32.mrb[0].mxu0
    %99 = vdwg.mxu0
    %v100 = vmax.f32 %v94, 0.0
    %v101 = vmax.f32 %v97, 0.0
    %v102 = vpack.c.bf16 %v101, %v100
    %v103 = vld [vmem:[#allocation2] sm:$0xff]
    %v104 = vld [vmem:[#allocation2 + $0x8] sm:$0xff]
    %v105 = vld [vmem:[%s3] sm:$0xf]
    %v106 = vld [vmem:[%s3 + $0x4] sm:$0xf]
    %v107 = vld [vmem:[%s3 + $0x8] sm:$0xf]
    %v108 = vld [vmem:[%s3 + $0xc] sm:$0xf]
    %v109 = vld [vmem:[%s3 + $0x10] sm:$0xf]
    %v110 = vld [vmem:[%s3 + $0x14] sm:$0xf]
    %v111 = vld [vmem:[%s3 + $0x18] sm:$0xf]
    %v112 = vld [vmem:[%s3 + $0x1c] sm:$0xf]
    %v113 = vld [vmem:[%s3 + $0x20] sm:$0xf]
    %v114 = vld [vmem:[%s3 + $0x24] sm:$0xf]
    %v115 = vld [vmem:[%s3 + $0x28] sm:$0xf]
    %v116 = vld [vmem:[%s3 + $0x2c] sm:$0xf]
    %v117 = vld [vmem:[%s3 + $0x30] sm:$0xf]
    %v118 = vld [vmem:[%s3 + $0x34] sm:$0xf]
    %v119 = vld [vmem:[%s3 + $0x38] sm:$0xf]
    %v120 = vld [vmem:[%s3 + $0x3c] sm:$0xf]
    %v137 = vunpack.c.l.b16 %v105
    %v138 = vunpack.c.l.b16 %v106
    %v139 = vunpack.c.l.b16 %v107
    %v140 = vunpack.c.l.b16 %v108
    %v141 = vunpack.c.l.b16 %v109
    %v142 = vunpack.c.l.b16 %v110
    %v143 = vunpack.c.l.b16 %v111
    %v144 = vunpack.c.l.b16 %v112
    %v145 = vunpack.c.l.b16 %v113
    %v146 = vunpack.c.l.b16 %v114
    %v147 = vunpack.c.l.b16 %v115
    %v148 = vunpack.c.l.b16 %v116
    %v149 = vunpack.c.l.b16 %v117
    %v150 = vunpack.c.l.b16 %v118
    %v151 = vunpack.c.l.b16 %v119
    %v152 = vunpack.c.l.b16 %v120
    %v153 = vpack.c.b16 %v138, %v137
    %v154 = vpack.c.b16 %v140, %v139
    %v155 = vpack.c.b16 %v142, %v141
    %v156 = vpack.c.b16 %v144, %v143
    %v157 = vpack.c.b16 %v146, %v145
    %v158 = vpack.c.b16 %v148, %v147
    %v159 = vpack.c.b16 %v150, %v149
    %v160 = vpack.c.b16 %v152, %v151
    %169 = vmatprep.subr.bf16.mxu0 0
    %170 = vmatpush1.bf16.msra.mxu0 %v153
    %171 = vmatprep.subr.bf16.mxu0 0
    %172 = vmatpush1.bf16.msra.mxu0 %v154
    %173 = vmatprep.subr.bf16.mxu0 0
    %174 = vmatpush1.bf16.msra.mxu0 %v155
    %175 = vmatprep.subr.bf16.mxu0 0
    %176 = vmatpush1.bf16.msra.mxu0 %v156
    %177 = vmatprep.subr.bf16.mxu0 0
    %178 = vmatpush1.bf16.msra.mxu0 %v157
    %179 = vmatprep.subr.bf16.mxu0 0
    %180 = vmatpush1.bf16.msra.mxu0 %v158
    %181 = vmatprep.subr.bf16.mxu0 0
    %182 = vmatpush1.bf16.msra.mxu0 %v159
    %183 = vmatprep.subr.bf16.mxu0 0
    %184 = vmatpush1.bf16.msra.mxu0 %v160
    %185 = vmatprep.subr.bf16.mxu0 0
    %186 = vmatpush1.bf16.msra.mxu0 0
    %187 = vmatprep.subr.bf16.mxu0 0
    %188 = vmatpush1.bf16.msra.mxu0 0
    %189 = vmatprep.subr.bf16.mxu0 0
    %190 = vmatpush1.bf16.msra.mxu0 0
    %191 = vmatprep.subr.bf16.mxu0 0
    %192 = vmatpush1.bf16.msra.mxu0 0
    %193 = vmatprep.subr.bf16.mxu0 0
    %194 = vmatpush1.bf16.msra.mxu0 0
    %195 = vmatprep.subr.bf16.mxu0 0
    %196 = vmatpush1.bf16.msra.mxu0 0
    %197 = vmatprep.subr.bf16.mxu0 0
    %198 = vmatpush1.bf16.msra.mxu0 0
    %199 = vmatprep.subr.bf16.mxu0 0
    %200 = vmatpush1.bf16.msra.mxu0 0
    %201 = vmatprep.mubr.bf16.mxu0 0
    %202 = vmatmul.mubr.bf16.gmra.mrb[0].mxu0 %v102
    %v203 = vpop.f32.mrb[0].mxu0
    %v204 = vadd.f32 0.0, %v203
    %v205 = vpop.f32.mrb[0].mxu0
    %v206 = vpop.f32.mrb[0].mxu0
    %v207 = vadd.f32 0.0, %v206
    %v208 = vpop.f32.mrb[0].mxu0
    %209 = vdwg.mxu0
    %v210 = vadd.f32 %v103, %v204
    %v211 = vadd.f32 %v104, %v207
    %212 = vst.msk [vmem:[#allocation2] sm:$0xff] %vm55, %v210
    %213 = vst.msk [vmem:[#allocation2 + $0x8] sm:$0xff] %vm55, %v211
    // Predicated region
    $region26: #{tpu_custom_call.1} parent=1 // pred_check
      %p214 = pneg %p22
    $region27: #{tpu_custom_call.1} parent=1 // pred_check_branch
      %216 = sbr.rel (%p214) target = $region29
    $region28: #{tpu_custom_call.1} parent=1 // pred_region
      %v217 = vld [vmem:[#allocation2] sm:$0xff]
      %v218 = vld [vmem:[#allocation2 + $0x8] sm:$0xff]
      %v219 = vld [vmem:[%s4] sm:$0x1]
      %v221 = vlaneseq
      %v222 = vshrl.u32 %v221, 7
      %v223 = vsub.s32 0, %v222
      %v224 = vrot.slane %v219, %v223
      %v226 = vadd.f32 %v217, %v224
      %v227 = vadd.f32 %v218, %v224
      %228 = vst.msk [vmem:[#allocation3] sm:$0xff] %vm55, %v226
      %229 = vst.msk [vmem:[#allocation3 + $0x8] sm:$0xff] %vm55, %v227
    $region29: #{tpu_custom_call.1} parent=1 // pred_fallthru
      _
    // Predicated region
    $region30: #{tpu_custom_call.1} parent=1 // pred_check
      _
    $region31: #{tpu_custom_call.1} parent=1 // pred_check_branch
      %231 = sbr.rel (0) target = $region33
    $region32: #{tpu_custom_call.1} parent=1 // pred_region
      %s233 = ssub.s32 256, 256
      %234 = vsyncadd [#allocation4], %s233
      %s235 = sshll.u32 [#allocation3], 4
      %s236 = int_to_ptr.vmem [resolvable:$true] %s235
      %241 = dma.vmem_to_hbm [thread:$0]  %s236, 256, %s5, [#allocation4], 128, 128, 8
    $region33: #{tpu_custom_call.1} parent=1 // pred_fallthru
      _
    // Predicated region
    $region34: #{tpu_custom_call.1} parent=1 // pred_check
      _
    $region35: #{tpu_custom_call.1} parent=1 // pred_check_branch
      %243 = sbr.rel (0) target = $region37
    $region36: #{tpu_custom_call.1} parent=1 // pred_region
      %244 = dma.done [#allocation4], 256
    $region37: #{tpu_custom_call.1} parent=1 // pred_fallthru
      _
    %245 = vsyncpa [#allocation4], 1

</llo_original>
